<compile_context>
chip_gen: v6e
topology: v6e:2x2x1
jax: 0.10.0
libtpu: 0.0.40
codegen_flags: <defaults>
</compile_context>

<pallas_src>
import functools

import jax
import jax.numpy as jnp
from jax.experimental import pallas as pl
from jax.experimental.pallas import tpu as pltpu

LANE = 128       # lane width (last dim)
SUBLANE = 8      # f32 sublane count (second-to-last dim)
MAX_TILE = 512   # batch-tile size (sweep 128/256/512 -> 512 near HBM roofline)


def _round_up(n, m):
    return ((n + m - 1) // m) * m


def _pad2d(a, rows, cols):
    return jnp.pad(a, ((0, rows - a.shape[0]), (0, cols - a.shape[1])))


# ---------------------------------------------------------------------------
# Kernels
# ---------------------------------------------------------------------------
def _apply_mlp(h, param_refs, activations):
    """Chain of Linear (+ ReLU / Sigmoid) layers on a VMEM-resident tile."""
    for i, act in enumerate(activations):
        w = param_refs[2 * i][...]
        b = param_refs[2 * i + 1][...]            # (1, out) -> row broadcast
        h = jnp.dot(h, w, preferred_element_type=jnp.float32) + b
        if act == "relu":
            h = jnp.maximum(h, 0.0)
        elif act == "sigmoid":
            h = jax.nn.sigmoid(h)                  # EUP slot, effectively free
    return h


def _mlp_kernel(*refs, activations):
    """Standalone MLP kernel: refs = (x, w0, b0, ..., wN, bN, out)."""
    x_ref, o_ref = refs[0], refs[-1]
    o_ref[...] = _apply_mlp(x_ref[...], refs[1:-1], activations).astype(o_ref.dtype)


def _wgan_fused_kernel(*refs, n_g, g_act, d_act):
    """Fused forward: x_fake = G(z); d_fake = D(x_fake); d_real = D(x_real)."""
    z_ref, xr_ref = refs[0], refs[1]
    xf_ref, d_ref = refs[-2], refs[-1]
    params = refs[2:-2]
    g_params = params[: 2 * n_g]
    d_params = params[2 * n_g:]

    x_fake = _apply_mlp(z_ref[...], g_params, g_act)
    xf_ref[...] = x_fake.astype(xf_ref.dtype)

    # Two sequential D passes on the already-resident weights: identical MXU
    # work to a concatenated pass, but no (2*tb, 128) copy and half the live
    # activation rows through every D layer.
    d_fake = _apply_mlp(x_fake, d_params, d_act)
    d_real = _apply_mlp(xr_ref[...], d_params, d_act)
    # Single lane-dense store of both discriminator outputs (one vst per tile).
    d_ref[...] = jnp.concatenate([d_fake, d_real], axis=1).astype(d_ref.dtype)


# ---------------------------------------------------------------------------
# Host-side wrappers
# ---------------------------------------------------------------------------
def _batch_tiling(batch):
    """Pick (padded_batch, tile) with big tiles but >= 2 grid steps (v7x)."""
    bp = _round_up(max(batch, SUBLANE), SUBLANE)
    n_tiles = -(-bp // MAX_TILE)                  # ceil
    if n_tiles < 2 and bp >= 2 * SUBLANE:
        n_tiles = 2      # let the "parallel" axis shard across 2 TensorCores
    tb = _round_up(-(-bp // n_tiles), SUBLANE)
    bp = n_tiles * tb
    return bp, tb


def _flatten(params):
    flat = []
    for w, b in params:
        flat += [w, b]
    return flat


def _param_specs(params):
    """VMEM-resident (constant index_map), single-buffered weight/bias specs."""
    specs = []
    for w, b in params:
        specs.append(pl.BlockSpec(w.shape, lambda i: (0, 0),
                                  pipeline_mode=pl.Buffered(1)))
        specs.append(pl.BlockSpec(b.shape, lambda i: (0, 0),
                                  pipeline_mode=pl.Buffered(1)))
    return specs


def _vmem_limit(params, io_tile_bytes):
    """Explicit VMEM budget: single-buffered weights + double-buffered tiles."""
    w_bytes = 4 * sum(w.size + b.size for w, b in params)
    need = w_bytes + 2 * io_tile_bytes + (4 << 20)
    return int(min(max(need, 16 << 20), 64 << 20))   # stay under v7x's 64 MiB


def _run_mlp(x, params, *, activations, out_dim):
    """Whole MLP in one pallas_call; batch-tiled grid, weights resident."""
    batch, in_dim = x.shape
    out_p = params[-1][0].shape[1]
    bp, tb = _batch_tiling(batch)
    xp = jnp.pad(x, ((0, bp - batch), (0, 0)))     # pad rows only, never lanes

    flat = _flatten(params)
    flops = 2 * bp * sum(w.shape[0] * w.shape[1] for w, _ in params)
    trans = bp * sum(w.shape[1] for (w, _), a in zip(params, activations)
                     if a == "sigmoid")
    nbytes = 4 * (bp * (in_dim + out_p)
                  + sum(w.size + b.size for w, b in params))
    io_tile_bytes = 4 * tb * (in_dim + out_p)

    kernel = functools.partial(_mlp_kernel, activations=tuple(activations))
    out = pl.pallas_call(
        kernel,
        grid=(bp // tb,),
        out_shape=jax.ShapeDtypeStruct((bp, out_p), jnp.float32),
        in_specs=[pl.BlockSpec((tb, in_dim), lambda i: (i, 0))] + _param_specs(params),
        out_specs=pl.BlockSpec((tb, out_p), lambda i: (i, 0)),
        compiler_params=pltpu.CompilerParams(
            dimension_semantics=("parallel",),
            vmem_limit_bytes=_vmem_limit(params, io_tile_bytes)),
        cost_estimate=pl.CostEstimate(flops=flops, transcendentals=trans,
                                      bytes_accessed=nbytes),
    )(xp, *flat)
    return out[:batch, :out_dim]


def _fused_forward(z, x_real, g_params, d_params, *, g_act, d_act, xdim):
    batch, zdim = z.shape
    xin = x_real.shape[1]
    xout = g_params[-1][0].shape[1]       # true xdim (G output is unpadded)
    dout_p = d_params[-1][0].shape[1]     # D output padded to 128 lanes
    bp, tb = _batch_tiling(batch)

    zp = jnp.pad(z, ((0, bp - batch), (0, 0)))
    xrp = jnp.pad(x_real, ((0, bp - batch), (0, 0)))

    all_params = g_params + d_params
    flat = _flatten(all_params)
    flops = (2 * bp * sum(w.shape[0] * w.shape[1] for w, _ in g_params)
             + 2 * (2 * bp) * sum(w.shape[0] * w.shape[1] for w, _ in d_params))
    trans = bp * xout                               # sigmoid on true xdim lanes
    nbytes = 4 * (bp * (zdim + xin + xout + 2 * dout_p)
                  + sum(w.size + b.size for w, b in all_params))
    io_tile_bytes = 4 * tb * (zdim + xin + xout + 2 * dout_p)

    kernel = functools.partial(_wgan_fused_kernel, n_g=len(g_params),
                               g_act=tuple(g_act), d_act=tuple(d_act))
    xf, d_both = pl.pallas_call(
        kernel,
        grid=(bp // tb,),
        out_shape=(jax.ShapeDtypeStruct((bp, xout), jnp.float32),
                   jax.ShapeDtypeStruct((bp, 2 * dout_p), jnp.float32)),
        in_specs=([pl.BlockSpec((tb, zdim), lambda i: (i, 0)),
                   pl.BlockSpec((tb, xin), lambda i: (i, 0))]
                  + _param_specs(g_params) + _param_specs(d_params)),
        out_specs=(pl.BlockSpec((tb, xout), lambda i: (i, 0)),
                   pl.BlockSpec((tb, 2 * dout_p), lambda i: (i, 0))),
        compiler_params=pltpu.CompilerParams(
            dimension_semantics=("parallel",),
            vmem_limit_bytes=_vmem_limit(all_params, io_tile_bytes)),
        cost_estimate=pl.CostEstimate(flops=flops, transcendentals=trans,
                                      bytes_accessed=nbytes),
    )(zp, xrp, *flat)
    d_fake = d_both[:batch, :1]
    d_real = d_both[:batch, dout_p:dout_p + 1]
    return xf[:batch, :xdim], d_fake, d_real


# ---------------------------------------------------------------------------
# Model
# ---------------------------------------------------------------------------
def _init_linear(key, in_dim, out_dim):
    """Mimics PyTorch nn.Linear default init: U(-1/sqrt(in), 1/sqrt(in))."""
    kw, kb = jax.random.split(key)
    bound = 1.0 / jnp.sqrt(jnp.float32(in_dim))
    w = jax.random.uniform(kw, (in_dim, out_dim), jnp.float32, -bound, bound)
    b = jax.random.uniform(kb, (out_dim,), jnp.float32, -bound, bound)
    return w, b


def _pad_params(ws, bs, *, pad_last_out):
    """Pad hidden dims to 128 lanes.  First-layer input rows stay UNPADDED so
    z / x_real never need host-side lane padding; G's last output stays
    unpadded so x_fake feeds D's (xdim, ...) first weight directly."""
    out = []
    n = len(ws)
    for idx, (w, b) in enumerate(zip(ws, bs)):
        ip = w.shape[0] if idx == 0 else _round_up(w.shape[0], LANE)
        if idx == n - 1 and not pad_last_out:
            op = w.shape[1]
        else:
            op = _round_up(w.shape[1], LANE)
        out.append((_pad2d(w, ip, op), _pad2d(b.reshape(1, -1), 1, op)))
    return out


class WGANPallas:
    def __init__(self, xdim, zdim, gdims, ddims, key):
        self.name = "wgan"
        self.xdim, self.zdim = xdim, zdim
        keys = jax.random.split(key, len(gdims) + 1 + len(ddims) + 1)
        ki = 0

        # Generator: [Linear+ReLU]*len(gdims), then Linear + Sigmoid
        self.g_w, self.g_b, self.g_act = [], [], []
        cur = zdim
        for dim in gdims:
            w, b = _init_linear(keys[ki], cur, dim); ki += 1
            self.g_w.append(w); self.g_b.append(b); self.g_act.append("relu")
            cur = dim
        w, b = _init_linear(keys[ki], cur, xdim); ki += 1
        self.g_w.append(w); self.g_b.append(b); self.g_act.append("sigmoid")

        # Discriminator: [Linear+ReLU]*len(ddims), then Linear (no activation)
        self.d_w, self.d_b, self.d_act = [], [], []
        cur = xdim
        for dim in ddims:
            w, b = _init_linear(keys[ki], cur, dim); ki += 1
            self.d_w.append(w); self.d_b.append(b); self.d_act.append("relu")
            cur = dim
        w, b = _init_linear(keys[ki], cur, 1); ki += 1
        self.d_w.append(w); self.d_b.append(b); self.d_act.append("none")

        # Zero-padded (lane-aligned) parameter copies for the kernels.
        self.g_params = _pad_params(self.g_w, self.g_b, pad_last_out=False)
        self.d_params = _pad_params(self.d_w, self.d_b, pad_last_out=True)

        # jit-compiled entry points (params passed as traced pytree args).
        self._gen_fn = jax.jit(functools.partial(
            _run_mlp, activations=tuple(self.g_act), out_dim=xdim))
        self._disc_fn = jax.jit(functools.partial(
            _run_mlp, activations=tuple(self.d_act), out_dim=1))
        self._fused_fn = jax.jit(functools.partial(
            _fused_forward, g_act=tuple(self.g_act), d_act=tuple(self.d_act),
            xdim=xdim))

    def gen(self, z):
        return self._gen_fn(z, self.g_params)

    def disc(self, x):
        return self._disc_fn(x, self.d_params)

    def gen_disc(self, z, x_real):
        """Fused forward: (G(z), D(G(z)), D(x_real)) in a single pallas_call."""
        return self._fused_fn(z, x_real, self.g_params, self.d_params)

    def forward(self):
        # PyTorch module's forward() literally returns 0.
        return 0


# ---------------------------------------------------------------------------
# Reference + driver
# ---------------------------------------------------------------------------
def _mlp_reference(x, weights, biases, activations):
    h = x
    for w, b, act in zip(weights, biases, activations):
        h = jnp.dot(h, w, precision=jax.lax.Precision.HIGHEST) + b
        if act == "relu":
            h = jnp.maximum(h, 0.0)
        elif act == "sigmoid":
            h = jax.nn.sigmoid(h)
    return h


if __name__ == "__main__":
    key = jax.random.PRNGKey(0)
    k_params, k_z, k_x = jax.random.split(key, 3)

    # Small shapes consistent with the module: xdim=16, zdim=8, hidden=32
    xdim, zdim = 16, 8
    gdims, ddims = [32, 32], [32, 32]
    batch = 2

    model = WGANPallas(xdim, zdim, gdims, ddims, k_params)

    z = jax.random.normal(k_z, (batch, zdim), jnp.float32)
    x_real = jax.random.normal(k_x, (batch, xdim), jnp.float32)

    # Fused forward: one pallas_call for G(z), D(G(z)), D(x_real).
    x_fake, d_fake, d_real = model.gen_disc(z, x_real)
    # Standalone generator / discriminator kernels (module API parity).
    x_fake_solo = model.gen(z)
    d_real_solo = model.disc(x_real)
    jax.block_until_ready((x_fake, d_fake, d_real, x_fake_solo, d_real_solo))

    # Correctness check against plain-JAX reference.
    x_fake_ref = _mlp_reference(z, model.g_w, model.g_b, model.g_act)
    d_fake_ref = _mlp_reference(x_fake_ref, model.d_w, model.d_b, model.d_act)
    d_real_ref = _mlp_reference(x_real, model.d_w, model.d_b, model.d_act)

    assert x_fake.shape == (batch, xdim)
    assert d_fake.shape == (batch, 1) and d_real.shape == (batch, 1)
    tol = dict(atol=1e-4, rtol=1e-4)
    assert jnp.allclose(x_fake, x_fake_ref, **tol)
    assert jnp.allclose(d_fake, d_fake_ref, **tol)
    assert jnp.allclose(d_real, d_real_ref, **tol)
    assert jnp.allclose(x_fake_solo, x_fake_ref, **tol)
    assert jnp.allclose(d_real_solo, d_real_ref, **tol)
    assert model.forward() == 0

    print("KERNEL_OK")
</pallas_src>

<mosaic_0001>
module attributes {stable_mosaic.version = 11 : i64} {
  func.func @_wgan_fused_kernel(%arg0: i32, %arg1: memref<8x8xf32, #tpu.memory_space<vmem>>, %arg2: memref<8x16xf32, #tpu.memory_space<vmem>>, %arg3: memref<8x128xf32, #tpu.memory_space<vmem>>, %arg4: memref<1x128xf32, #tpu.memory_space<vmem>>, %arg5: memref<128x128xf32, #tpu.memory_space<vmem>>, %arg6: memref<1x128xf32, #tpu.memory_space<vmem>>, %arg7: memref<128x16xf32, #tpu.memory_space<vmem>>, %arg8: memref<1x16xf32, #tpu.memory_space<vmem>>, %arg9: memref<16x128xf32, #tpu.memory_space<vmem>>, %arg10: memref<1x128xf32, #tpu.memory_space<vmem>>, %arg11: memref<128x128xf32, #tpu.memory_space<vmem>>, %arg12: memref<1x128xf32, #tpu.memory_space<vmem>>, %arg13: memref<128x128xf32, #tpu.memory_space<vmem>>, %arg14: memref<1x128xf32, #tpu.memory_space<vmem>>, %arg15: memref<8x16xf32, #tpu.memory_space<vmem>>, %arg16: memref<8x256xf32, #tpu.memory_space<vmem>>) attributes {dimension_semantics = [#tpu.dimension_semantics<parallel>], iteration_bounds = array<i64: 1>, scalar_prefetch = 0 : i64, scratch_operands = 0 : i64, tpu.core_type = #tpu.core_type<tc>, window_params = [{transform_indices = @transform_0, window_bounds = array<i64: 8, 8>}, {transform_indices = @transform_1, window_bounds = array<i64: 8, 16>}, {pipeline_mode = #tpu.pipeline_mode<synchronous>, transform_indices = @transform_2, window_bounds = array<i64: 8, 128>}, {pipeline_mode = #tpu.pipeline_mode<synchronous>, transform_indices = @transform_3, window_bounds = array<i64: 1, 128>}, {pipeline_mode = #tpu.pipeline_mode<synchronous>, transform_indices = @transform_4, window_bounds = array<i64: 128, 128>}, {pipeline_mode = #tpu.pipeline_mode<synchronous>, transform_indices = @transform_5, window_bounds = array<i64: 1, 128>}, {pipeline_mode = #tpu.pipeline_mode<synchronous>, transform_indices = @transform_6, window_bounds = array<i64: 128, 16>}, {pipeline_mode = #tpu.pipeline_mode<synchronous>, transform_indices = @transform_7, window_bounds = array<i64: 1, 16>}, {pipeline_mode = #tpu.pipeline_mode<synchronous>, transform_indices = @transform_8, window_bounds = array<i64: 16, 128>}, {pipeline_mode = #tpu.pipeline_mode<synchronous>, transform_indices = @transform_9, window_bounds = array<i64: 1, 128>}, {pipeline_mode = #tpu.pipeline_mode<synchronous>, transform_indices = @transform_10, window_bounds = array<i64: 128, 128>}, {pipeline_mode = #tpu.pipeline_mode<synchronous>, transform_indices = @transform_11, window_bounds = array<i64: 1, 128>}, {pipeline_mode = #tpu.pipeline_mode<synchronous>, transform_indices = @transform_12, window_bounds = array<i64: 128, 128>}, {pipeline_mode = #tpu.pipeline_mode<synchronous>, transform_indices = @transform_13, window_bounds = array<i64: 1, 128>}, {transform_indices = @transform_14, window_bounds = array<i64: 8, 16>}, {transform_indices = @transform_15, window_bounds = array<i64: 8, 256>}]} {
    %c0 = arith.constant 0 : index
    %c0_0 = arith.constant 0 : index
    %0 = vector.load %arg1[%c0, %c0_0] : memref<8x8xf32, #tpu.memory_space<vmem>>, vector<8x8xf32>
    %c0_1 = arith.constant 0 : index
    %c0_2 = arith.constant 0 : index
    %1 = vector.load %arg3[%c0_1, %c0_2] : memref<8x128xf32, #tpu.memory_space<vmem>>, vector<8x128xf32>
    %c0_3 = arith.constant 0 : index
    %c0_4 = arith.constant 0 : index
    %2 = vector.load %arg4[%c0_3, %c0_4] : memref<1x128xf32, #tpu.memory_space<vmem>>, vector<1x128xf32>
    %cst = arith.constant dense<0.000000e+00> : vector<8x128xf32>
    %3 = tpu.matmul %0, %1, %cst {dimension_numbers = #tpu.dot_dimension_numbers<[1], [0], [0], [1], [0, 0, 1, 1], [], []>} : vector<8x8xf32>, vector<8x128xf32>, vector<8x128xf32> -> vector<8x128xf32>
    %4 = vector.broadcast %2 : vector<1x128xf32> to vector<8x128xf32>
    %5 = arith.addf %3, %4 : vector<8x128xf32>
    %cst_5 = arith.constant 0.000000e+00 : f32
    %6 = vector.broadcast %cst_5 : f32 to vector<8x128xf32>
    %7 = arith.maximumf %5, %6 : vector<8x128xf32>
    %c0_6 = arith.constant 0 : index
    %c0_7 = arith.constant 0 : index
    %8 = vector.load %arg5[%c0_6, %c0_7] : memref<128x128xf32, #tpu.memory_space<vmem>>, vector<128x128xf32>
    %c0_8 = arith.constant 0 : index
    %c0_9 = arith.constant 0 : index
    %9 = vector.load %arg6[%c0_8, %c0_9] : memref<1x128xf32, #tpu.memory_space<vmem>>, vector<1x128xf32>
    %cst_10 = arith.constant dense<0.000000e+00> : vector<8x128xf32>
    %10 = tpu.matmul %7, %8, %cst_10 {dimension_numbers = #tpu.dot_dimension_numbers<[1], [0], [0], [1], [0, 0, 1, 1], [], []>} : vector<8x128xf32>, vector<128x128xf32>, vector<8x128xf32> -> vector<8x128xf32>
    %11 = vector.broadcast %9 : vector<1x128xf32> to vector<8x128xf32>
    %12 = arith.addf %10, %11 : vector<8x128xf32>
    %cst_11 = arith.constant 0.000000e+00 : f32
    %13 = vector.broadcast %cst_11 : f32 to vector<8x128xf32>
    %14 = arith.maximumf %12, %13 : vector<8x128xf32>
    %c0_12 = arith.constant 0 : index
    %c0_13 = arith.constant 0 : index
    %15 = vector.load %arg7[%c0_12, %c0_13] : memref<128x16xf32, #tpu.memory_space<vmem>>, vector<128x16xf32>
    %c0_14 = arith.constant 0 : index
    %c0_15 = arith.constant 0 : index
    %16 = vector.load %arg8[%c0_14, %c0_15] : memref<1x16xf32, #tpu.memory_space<vmem>>, vector<1x16xf32>
    %cst_16 = arith.constant dense<0.000000e+00> : vector<8x16xf32>
    %17 = tpu.matmul %14, %15, %cst_16 {dimension_numbers = #tpu.dot_dimension_numbers<[1], [0], [0], [1], [0, 0, 1, 1], [], []>} : vector<8x128xf32>, vector<128x16xf32>, vector<8x16xf32> -> vector<8x16xf32>
    %18 = vector.broadcast %16 : vector<1x16xf32> to vector<8x16xf32>
    %19 = arith.addf %17, %18 : vector<8x16xf32>
    %20 = arith.negf %19 : vector<8x16xf32>
    %21 = math.exp %20 : vector<8x16xf32>
    %cst_17 = arith.constant 1.000000e+00 : f32
    %22 = vector.broadcast %cst_17 : f32 to vector<8x16xf32>
    %23 = arith.addf %22, %21 : vector<8x16xf32>
    %24 = arith.divf %22, %23 : vector<8x16xf32>
    %c0_18 = arith.constant 0 : index
    %c0_19 = arith.constant 0 : index
    %25 = vector.load %arg15[%c0_18, %c0_19] : memref<8x16xf32, #tpu.memory_space<vmem>>, vector<8x16xf32>
    tpu.vector_store %arg15[%c0_18, %c0_19], %24 {strides = array<i32>} : memref<8x16xf32, #tpu.memory_space<vmem>>, vector<8x16xf32>,
    %c0_20 = arith.constant 0 : index
    %c0_21 = arith.constant 0 : index
    %26 = vector.load %arg9[%c0_20, %c0_21] : memref<16x128xf32, #tpu.memory_space<vmem>>, vector<16x128xf32>
    %c0_22 = arith.constant 0 : index
    %c0_23 = arith.constant 0 : index
    %27 = vector.load %arg10[%c0_22, %c0_23] : memref<1x128xf32, #tpu.memory_space<vmem>>, vector<1x128xf32>
    %cst_24 = arith.constant dense<0.000000e+00> : vector<8x128xf32>
    %28 = tpu.matmul %24, %26, %cst_24 {dimension_numbers = #tpu.dot_dimension_numbers<[1], [0], [0], [1], [0, 0, 1, 1], [], []>} : vector<8x16xf32>, vector<16x128xf32>, vector<8x128xf32> -> vector<8x128xf32>
    %29 = vector.broadcast %27 : vector<1x128xf32> to vector<8x128xf32>
    %30 = arith.addf %28, %29 : vector<8x128xf32>
    %cst_25 = arith.constant 0.000000e+00 : f32
    %31 = vector.broadcast %cst_25 : f32 to vector<8x128xf32>
    %32 = arith.maximumf %30, %31 : vector<8x128xf32>
    %c0_26 = arith.constant 0 : index
    %c0_27 = arith.constant 0 : index
    %33 = vector.load %arg11[%c0_26, %c0_27] : memref<128x128xf32, #tpu.memory_space<vmem>>, vector<128x128xf32>
    %c0_28 = arith.constant 0 : index
    %c0_29 = arith.constant 0 : index
    %34 = vector.load %arg12[%c0_28, %c0_29] : memref<1x128xf32, #tpu.memory_space<vmem>>, vector<1x128xf32>
    %cst_30 = arith.constant dense<0.000000e+00> : vector<8x128xf32>
    %35 = tpu.matmul %32, %33, %cst_30 {dimension_numbers = #tpu.dot_dimension_numbers<[1], [0], [0], [1], [0, 0, 1, 1], [], []>} : vector<8x128xf32>, vector<128x128xf32>, vector<8x128xf32> -> vector<8x128xf32>
    %36 = vector.broadcast %34 : vector<1x128xf32> to vector<8x128xf32>
    %37 = arith.addf %35, %36 : vector<8x128xf32>
    %cst_31 = arith.constant 0.000000e+00 : f32
    %38 = vector.broadcast %cst_31 : f32 to vector<8x128xf32>
    %39 = arith.maximumf %37, %38 : vector<8x128xf32>
    %c0_32 = arith.constant 0 : index
    %c0_33 = arith.constant 0 : index
    %40 = vector.load %arg13[%c0_32, %c0_33] : memref<128x128xf32, #tpu.memory_space<vmem>>, vector<128x128xf32>
    %c0_34 = arith.constant 0 : index
    %c0_35 = arith.constant 0 : index
    %41 = vector.load %arg14[%c0_34, %c0_35] : memref<1x128xf32, #tpu.memory_space<vmem>>, vector<1x128xf32>
    %cst_36 = arith.constant dense<0.000000e+00> : vector<8x128xf32>
    %42 = tpu.matmul %39, %40, %cst_36 {dimension_numbers = #tpu.dot_dimension_numbers<[1], [0], [0], [1], [0, 0, 1, 1], [], []>} : vector<8x128xf32>, vector<128x128xf32>, vector<8x128xf32> -> vector<8x128xf32>
    %43 = vector.broadcast %41 : vector<1x128xf32> to vector<8x128xf32>
    %44 = arith.addf %42, %43 : vector<8x128xf32>
    %c0_37 = arith.constant 0 : index
    %c0_38 = arith.constant 0 : index
    %45 = vector.load %arg2[%c0_37, %c0_38] : memref<8x16xf32, #tpu.memory_space<vmem>>, vector<8x16xf32>
    %c0_39 = arith.constant 0 : index
    %c0_40 = arith.constant 0 : index
    %46 = vector.load %arg9[%c0_39, %c0_40] : memref<16x128xf32, #tpu.memory_space<vmem>>, vector<16x128xf32>
    %c0_41 = arith.constant 0 : index
    %c0_42 = arith.constant 0 : index
    %47 = vector.load %arg10[%c0_41, %c0_42] : memref<1x128xf32, #tpu.memory_space<vmem>>, vector<1x128xf32>
    %cst_43 = arith.constant dense<0.000000e+00> : vector<8x128xf32>
    %48 = tpu.matmul %45, %46, %cst_43 {dimension_numbers = #tpu.dot_dimension_numbers<[1], [0], [0], [1], [0, 0, 1, 1], [], []>} : vector<8x16xf32>, vector<16x128xf32>, vector<8x128xf32> -> vector<8x128xf32>
    %49 = vector.broadcast %47 : vector<1x128xf32> to vector<8x128xf32>
    %50 = arith.addf %48, %49 : vector<8x128xf32>
    %cst_44 = arith.constant 0.000000e+00 : f32
    %51 = vector.broadcast %cst_44 : f32 to vector<8x128xf32>
    %52 = arith.maximumf %50, %51 : vector<8x128xf32>
    %c0_45 = arith.constant 0 : index
    %c0_46 = arith.constant 0 : index
    %53 = vector.load %arg11[%c0_45, %c0_46] : memref<128x128xf32, #tpu.memory_space<vmem>>, vector<128x128xf32>
    %c0_47 = arith.constant 0 : index
    %c0_48 = arith.constant 0 : index
    %54 = vector.load %arg12[%c0_47, %c0_48] : memref<1x128xf32, #tpu.memory_space<vmem>>, vector<1x128xf32>
    %cst_49 = arith.constant dense<0.000000e+00> : vector<8x128xf32>
    %55 = tpu.matmul %52, %53, %cst_49 {dimension_numbers = #tpu.dot_dimension_numbers<[1], [0], [0], [1], [0, 0, 1, 1], [], []>} : vector<8x128xf32>, vector<128x128xf32>, vector<8x128xf32> -> vector<8x128xf32>
    %56 = vector.broadcast %54 : vector<1x128xf32> to vector<8x128xf32>
    %57 = arith.addf %55, %56 : vector<8x128xf32>
    %cst_50 = arith.constant 0.000000e+00 : f32
    %58 = vector.broadcast %cst_50 : f32 to vector<8x128xf32>
    %59 = arith.maximumf %57, %58 : vector<8x128xf32>
    %c0_51 = arith.constant 0 : index
    %c0_52 = arith.constant 0 : index
    %60 = vector.load %arg13[%c0_51, %c0_52] : memref<128x128xf32, #tpu.memory_space<vmem>>, vector<128x128xf32>
    %c0_53 = arith.constant 0 : index
    %c0_54 = arith.constant 0 : index
    %61 = vector.load %arg14[%c0_53, %c0_54] : memref<1x128xf32, #tpu.memory_space<vmem>>, vector<1x128xf32>
    %cst_55 = arith.constant dense<0.000000e+00> : vector<8x128xf32>
    %62 = tpu.matmul %59, %60, %cst_55 {dimension_numbers = #tpu.dot_dimension_numbers<[1], [0], [0], [1], [0, 0, 1, 1], [], []>} : vector<8x128xf32>, vector<128x128xf32>, vector<8x128xf32> -> vector<8x128xf32>
    %63 = vector.broadcast %61 : vector<1x128xf32> to vector<8x128xf32>
    %64 = arith.addf %62, %63 : vector<8x128xf32>
    %65 = tpu.concatenate %44, %64 in 1 : vector<8x128xf32>, vector<8x128xf32> -> vector<8x256xf32>
    %c0_56 = arith.constant 0 : index
    %c0_57 = arith.constant 0 : index
    %66 = vector.load %arg16[%c0_56, %c0_57] : memref<8x256xf32, #tpu.memory_space<vmem>>, vector<8x256xf32>
    tpu.vector_store %arg16[%c0_56, %c0_57], %65 {strides = array<i32>} : memref<8x256xf32, #tpu.memory_space<vmem>>, vector<8x256xf32>,
    return
  }
  func.func @transform_0(%arg0: i32) -> (i32, i32) {
    %c0_i32 = arith.constant 0 : i32
    %c0_i32_0 = arith.constant 0 : i32
    return %arg0, %c0_i32 : i32, i32
  }
  func.func @transform_1(%arg0: i32) -> (i32, i32) {
    %c0_i32 = arith.constant 0 : i32
    %c0_i32_0 = arith.constant 0 : i32
    return %arg0, %c0_i32 : i32, i32
  }
  func.func @transform_2(%arg0: i32) -> (i32, i32) {
    %c0_i32 = arith.constant 0 : i32
    %c0_i32_0 = arith.constant 0 : i32
    %c0_i32_1 = arith.constant 0 : i32
    return %c0_i32, %c0_i32_0 : i32, i32
  }
  func.func @transform_3(%arg0: i32) -> (i32, i32) {
    %c0_i32 = arith.constant 0 : i32
    %c0_i32_0 = arith.constant 0 : i32
    %c0_i32_1 = arith.constant 0 : i32
    return %c0_i32, %c0_i32_0 : i32, i32
  }
  func.func @transform_4(%arg0: i32) -> (i32, i32) {
    %c0_i32 = arith.constant 0 : i32
    %c0_i32_0 = arith.constant 0 : i32
    %c0_i32_1 = arith.constant 0 : i32
    return %c0_i32, %c0_i32_0 : i32, i32
  }
  func.func @transform_5(%arg0: i32) -> (i32, i32) {
    %c0_i32 = arith.constant 0 : i32
    %c0_i32_0 = arith.constant 0 : i32
    %c0_i32_1 = arith.constant 0 : i32
    return %c0_i32, %c0_i32_0 : i32, i32
  }
  func.func @transform_6(%arg0: i32) -> (i32, i32) {
    %c0_i32 = arith.constant 0 : i32
    %c0_i32_0 = arith.constant 0 : i32
    %c0_i32_1 = arith.constant 0 : i32
    return %c0_i32, %c0_i32_0 : i32, i32
  }
  func.func @transform_7(%arg0: i32) -> (i32, i32) {
    %c0_i32 = arith.constant 0 : i32
    %c0_i32_0 = arith.constant 0 : i32
    %c0_i32_1 = arith.constant 0 : i32
    return %c0_i32, %c0_i32_0 : i32, i32
  }
  func.func @transform_8(%arg0: i32) -> (i32, i32) {
    %c0_i32 = arith.constant 0 : i32
    %c0_i32_0 = arith.constant 0 : i32
    %c0_i32_1 = arith.constant 0 : i32
    return %c0_i32, %c0_i32_0 : i32, i32
  }
  func.func @transform_9(%arg0: i32) -> (i32, i32) {
    %c0_i32 = arith.constant 0 : i32
    %c0_i32_0 = arith.constant 0 : i32
    %c0_i32_1 = arith.constant 0 : i32
    return %c0_i32, %c0_i32_0 : i32, i32
  }
  func.func @transform_10(%arg0: i32) -> (i32, i32) {
    %c0_i32 = arith.constant 0 : i32
    %c0_i32_0 = arith.constant 0 : i32
    %c0_i32_1 = arith.constant 0 : i32
    return %c0_i32, %c0_i32_0 : i32, i32
  }
  func.func @transform_11(%arg0: i32) -> (i32, i32) {
    %c0_i32 = arith.constant 0 : i32
    %c0_i32_0 = arith.constant 0 : i32
    %c0_i32_1 = arith.constant 0 : i32
    return %c0_i32, %c0_i32_0 : i32, i32
  }
  func.func @transform_12(%arg0: i32) -> (i32, i32) {
    %c0_i32 = arith.constant 0 : i32
    %c0_i32_0 = arith.constant 0 : i32
    %c0_i32_1 = arith.constant 0 : i32
    return %c0_i32, %c0_i32_0 : i32, i32
  }
  func.func @transform_13(%arg0: i32) -> (i32, i32) {
    %c0_i32 = arith.constant 0 : i32
    %c0_i32_0 = arith.constant 0 : i32
    %c0_i32_1 = arith.constant 0 : i32
    return %c0_i32, %c0_i32_0 : i32, i32
  }
  func.func @transform_14(%arg0: i32) -> (i32, i32) {
    %c0_i32 = arith.constant 0 : i32
    %c0_i32_0 = arith.constant 0 : i32
    return %arg0, %c0_i32 : i32, i32
  }
  func.func @transform_15(%arg0: i32) -> (i32, i32) {
    %c0_i32 = arith.constant 0 : i32
    %c0_i32_0 = arith.constant 0 : i32
    return %arg0, %c0_i32 : i32, i32
  }
}

</mosaic_0001>

<llo_original>
// kernel: _fused_forward.1
$region0: #{_fused_forward.1}
  #allocation0 [shape = 'u32[]', space=smem, size = 0x4, offset = 0x4, fixed_abs, tag = 'smem constant byte address 0x4 - core index']
  #allocation1 [shape = 'u32[144,128]{1,0:T(1,128)}', space=vmem, size = 0x12000, scoped, tag = 'internal scratch']
  %s0 = inlined_call_operand.vmem [shape: f32[8,8], index: 0, kind: input, shape index: {}]
  %s1 = inlined_call_operand.vmem [shape: f32[8,16], index: 1, kind: input, shape index: {}]
  %s2 = inlined_call_operand.vmem [shape: f32[8,128], index: 2, kind: input, shape index: {}]
  %s3 = inlined_call_operand.vmem [shape: f32[1,128], index: 3, kind: input, shape index: {}]
  %s4 = inlined_call_operand.vmem [shape: f32[128,128], index: 4, kind: input, shape index: {}]
  %s5 = inlined_call_operand.vmem [shape: f32[1,128], index: 5, kind: input, shape index: {}]
  %s6 = inlined_call_operand.vmem [shape: f32[128,16], index: 6, kind: input, shape index: {}]
  %s7 = inlined_call_operand.vmem [shape: f32[1,16], index: 7, kind: input, shape index: {}]
  %s8 = inlined_call_operand.vmem [shape: f32[16,128], index: 8, kind: input, shape index: {}]
  %s9 = inlined_call_operand.vmem [shape: f32[1,128], index: 9, kind: input, shape index: {}]
  %s10 = inlined_call_operand.hbm [shape: f32[128,128], index: 10, kind: input, shape index: {}]
  %s11 = inlined_call_operand.vmem [shape: f32[1,128], index: 11, kind: input, shape index: {}]
  %s12 = inlined_call_operand.hbm [shape: f32[128,128], index: 12, kind: input, shape index: {}]
  %s13 = inlined_call_operand.vmem [shape: f32[1,128], index: 13, kind: input, shape index: {}]
  %s14 = inlined_call_operand.vmem [shape: f32[8,16], index: 14, kind: output, shape index: {0}]
  %s15 = inlined_call_operand.vmem [shape: f32[8,256], index: 15, kind: output, shape index: {1}]
  %16 = xla_tuple %s14, %s15
  %s17 = sld [smem:[#allocation0]]
  $region82: #{_fused_forward.1} parent=0
    _
  %s19 = ssub.s32 1, %s17
  %s20 = scalar_select 0, %s19, %s17
  $region1: #{_fused_forward.1} parent=0
    #allocation2 [shape = 'u8[65536]{0}', space=vmem, size = 0x10000, scoped, tag = 'input window, operand 10, single buffered']
    #allocation3 [shape = 's32[1]{0}', space=sflag, size = 0x4, scoped, tag = 'scoped memory for _fused_forward.1']
    #allocation4 [shape = 'u8[65536]{0}', space=vmem, size = 0x10000, scoped, tag = 'input window, operand 12, single buffered']
    #allocation5 [shape = 's32[1]{0}', space=sflag, size = 0x4, scoped, tag = 'scoped memory for _fused_forward.1']
    %21 = vsyncpa [#allocation3], 0
    %22 = vsyncpa [#allocation5], 0
    // Predicated region
    $region2: #{_fused_forward.1} parent=1 // pred_check
      _
    $region3: #{_fused_forward.1} parent=1 // pred_check_branch
      %24 = sbr.rel (0) target = $region5
    $region4: #{_fused_forward.1} parent=1 // pred_region
      _
    $region5: #{_fused_forward.1} parent=1 // pred_fallthru
      _
    // Predicated region
    $region6: #{_fused_forward.1} parent=1 // pred_check
      _
    $region7: #{_fused_forward.1} parent=1 // pred_check_branch
      %26 = sbr.rel (0) target = $region9
    $region8: #{_fused_forward.1} parent=1 // pred_region
      _
    $region9: #{_fused_forward.1} parent=1 // pred_fallthru
      _
    // Predicated region
    $region10: #{_fused_forward.1} parent=1 // pred_check
      _
    $region11: #{_fused_forward.1} parent=1 // pred_check_branch
      %28 = sbr.rel (0) target = $region13
    $region12: #{_fused_forward.1} parent=1 // pred_region
      _
    $region13: #{_fused_forward.1} parent=1 // pred_fallthru
      _
    // Predicated region
    $region14: #{_fused_forward.1} parent=1 // pred_check
      _
    $region15: #{_fused_forward.1} parent=1 // pred_check_branch
      %30 = sbr.rel (0) target = $region17
    $region16: #{_fused_forward.1} parent=1 // pred_region
      _
    $region17: #{_fused_forward.1} parent=1 // pred_fallthru
      _
    // Predicated region
    $region18: #{_fused_forward.1} parent=1 // pred_check
      _
    $region19: #{_fused_forward.1} parent=1 // pred_check_branch
      %32 = sbr.rel (0) target = $region21
    $region20: #{_fused_forward.1} parent=1 // pred_region
      _
    $region21: #{_fused_forward.1} parent=1 // pred_fallthru
      _
    // Predicated region
    $region22: #{_fused_forward.1} parent=1 // pred_check
      _
    $region23: #{_fused_forward.1} parent=1 // pred_check_branch
      %34 = sbr.rel (0) target = $region25
    $region24: #{_fused_forward.1} parent=1 // pred_region
      _
    $region25: #{_fused_forward.1} parent=1 // pred_fallthru
      _
    // Predicated region
    $region26: #{_fused_forward.1} parent=1 // pred_check
      _
    $region27: #{_fused_forward.1} parent=1 // pred_check_branch
      %36 = sbr.rel (0) target = $region29
    $region28: #{_fused_forward.1} parent=1 // pred_region
      _
    $region29: #{_fused_forward.1} parent=1 // pred_fallthru
      _
    // Predicated region
    $region30: #{_fused_forward.1} parent=1 // pred_check
      _
    $region31: #{_fused_forward.1} parent=1 // pred_check_branch
      %38 = sbr.rel (0) target = $region33
    $region32: #{_fused_forward.1} parent=1 // pred_region
      _
    $region33: #{_fused_forward.1} parent=1 // pred_fallthru
      _
    // Predicated region
    $region34: #{_fused_forward.1} parent=1 // pred_check
      _
    $region35: #{_fused_forward.1} parent=1 // pred_check_branch
      %40 = sbr.rel (0) target = $region37
    $region36: #{_fused_forward.1} parent=1 // pred_region
      _
    $region37: #{_fused_forward.1} parent=1 // pred_fallthru
      _
    // Predicated region
    $region38: #{_fused_forward.1} parent=1 // pred_check
      _
    $region39: #{_fused_forward.1} parent=1 // pred_check_branch
      %42 = sbr.rel (0) target = $region41
    $region40: #{_fused_forward.1} parent=1 // pred_region
      _
    $region41: #{_fused_forward.1} parent=1 // pred_fallthru
      _
    // Predicated region
    $region42: #{_fused_forward.1} parent=1 // pred_check
      _
    $region43: #{_fused_forward.1} parent=1 // pred_check_branch
      %44 = sbr.rel (0) target = $region45
    $region44: #{_fused_forward.1} parent=1 // pred_region
      %s46 = ssub.s32 2048, 2048
      %47 = vsyncadd [#allocation3], %s46
      %s48 = sshll.u32 [#allocation2], 4
      %s49 = int_to_ptr.vmem [resolvable:$true] %s48
      %54 = dma.hbm_to_vmem [thread:$0]  %s10, 2048, %s49, [#allocation3], 128, 128, 8
    $region45: #{_fused_forward.1} parent=1 // pred_fallthru
      _
    // Predicated region
    $region46: #{_fused_forward.1} parent=1 // pred_check
      _
    $region47: #{_fused_forward.1} parent=1 // pred_check_branch
      %56 = sbr.rel (0) target = $region49
    $region48: #{_fused_forward.1} parent=1 // pred_region
      _
    $region49: #{_fused_forward.1} parent=1 // pred_fallthru
      _
    // Predicated region
    $region50: #{_fused_forward.1} parent=1 // pred_check
      _
    $region51: #{_fused_forward.1} parent=1 // pred_check_branch
      %58 = sbr.rel (0) target = $region53
    $region52: #{_fused_forward.1} parent=1 // pred_region
      %s60 = ssub.s32 2048, 2048
      %61 = vsyncadd [#allocation5], %s60
      %s62 = sshll.u32 [#allocation4], 4
      %s63 = int_to_ptr.vmem [resolvable:$true] %s62
      %68 = dma.hbm_to_vmem [thread:$0]  %s12, 2048, %s63, [#allocation5], 128, 128, 8
    $region53: #{_fused_forward.1} parent=1 // pred_fallthru
      _
    // Predicated region
    $region54: #{_fused_forward.1} parent=1 // pred_check
      _
    $region55: #{_fused_forward.1} parent=1 // pred_check_branch
      %70 = sbr.rel (0) target = $region57
    $region56: #{_fused_forward.1} parent=1 // pred_region
      _
    $region57: #{_fused_forward.1} parent=1 // pred_fallthru
      _
    // Predicated region
    $region58: #{_fused_forward.1} parent=1 // pred_check
      _
    $region59: #{_fused_forward.1} parent=1 // pred_check_branch
      %72 = sbr.rel (0) target = $region61
    $region60: #{_fused_forward.1} parent=1 // pred_region
      %73 = dma.done [#allocation3], 2048
    $region61: #{_fused_forward.1} parent=1 // pred_fallthru
      _
    // Predicated region
    $region62: #{_fused_forward.1} parent=1 // pred_check
      _
    $region63: #{_fused_forward.1} parent=1 // pred_check_branch
      %75 = sbr.rel (0) target = $region65
    $region64: #{_fused_forward.1} parent=1 // pred_region
      %76 = dma.done [#allocation5], 2048
    $region65: #{_fused_forward.1} parent=1 // pred_fallthru
      _
    %v77 = vld [vmem:[%s0] sm:$0xff]
    %v78 = vld [vmem:[%s2] sm:$0xff]
    %v79 = vld [vmem:[%s3] sm:$0x1]
    %v81 = vlaneseq
    %v82 = vshrl.u32 %v81, 7
    %v83 = vsub.s32 0, %v82
    %v84 = vrot.slane %v79, %v83
    %vm86 = vcmask 64512
    %v88 = vsel %vm86, %v77, 0
    %90 = vmatprep.subr.mxu0 0.0
    %91 = vmatpush1.msra.mxu0 0.0
    %92 = vmatprep.subr.mxu0 0.0
    %93 = vmatpush1.msra.mxu0 0.0
    %94 = vmatprep.subr.mxu0 0.0
    %95 = vmatpush1.msra.mxu0 0.0
    %96 = vmatprep.subr.mxu0 0.0
    %97 = vmatpush1.msra.mxu0 0.0
    %98 = vmatprep.subr.mxu0 0.0
    %99 = vmatpush1.msra.mxu0 0.0
    %100 = vmatprep.subr.mxu0 0.0
    %101 = vmatpush1.msra.mxu0 0.0
    %102 = vmatprep.subr.mxu0 0.0
    %103 = vmatpush1.msra.mxu0 0.0
    %104 = vmatprep.subr.mxu0 0.0
    %105 = vmatpush1.msra.mxu0 0.0
    %106 = vmatprep.subr.mxu0 0.0
    %107 = vmatpush1.msra.mxu0 0.0
    %108 = vmatprep.subr.mxu0 0.0
    %109 = vmatpush1.msra.mxu0 0.0
    %110 = vmatprep.subr.mxu0 0.0
    %111 = vmatpush1.msra.mxu0 0.0
    %112 = vmatprep.subr.mxu0 0.0
    %113 = vmatpush1.msra.mxu0 0.0
    %114 = vmatprep.subr.mxu0 0.0
    %115 = vmatpush1.msra.mxu0 0.0
    %116 = vmatprep.subr.mxu0 0.0
    %117 = vmatpush1.msra.mxu0 0.0
    %118 = vmatprep.subr.mxu0 0.0
    %119 = vmatpush1.msra.mxu0 0.0
    %120 = vmatprep.subr.mxu0 0.0
    %121 = vmatpush1.msra.mxu0 %v78
    %122 = vmatprep.subr.mxu0 0.0
    %123 = vmatpush2.msra.mxu0 0.0
    %124 = vmatprep.subr.mxu0 0.0
    %125 = vmatpush2.msra.mxu0 0.0
    %126 = vmatprep.subr.mxu0 0.0
    %127 = vmatpush2.msra.mxu0 0.0
    %128 = vmatprep.subr.mxu0 0.0
    %129 = vmatpush2.msra.mxu0 0.0
    %130 = vmatprep.subr.mxu0 0.0
    %131 = vmatpush2.msra.mxu0 0.0
    %132 = vmatprep.subr.mxu0 0.0
    %133 = vmatpush2.msra.mxu0 0.0
    %134 = vmatprep.subr.mxu0 0.0
    %135 = vmatpush2.msra.mxu0 0.0
    %136 = vmatprep.subr.mxu0 0.0
    %137 = vmatpush2.msra.mxu0 0.0
    %138 = vmatprep.subr.mxu0 0.0
    %139 = vmatpush2.msra.mxu0 0.0
    %140 = vmatprep.subr.mxu0 0.0
    %141 = vmatpush2.msra.mxu0 0.0
    %142 = vmatprep.subr.mxu0 0.0
    %143 = vmatpush2.msra.mxu0 0.0
    %144 = vmatprep.subr.mxu0 0.0
    %145 = vmatpush2.msra.mxu0 0.0
    %146 = vmatprep.subr.mxu0 0.0
    %147 = vmatpush2.msra.mxu0 0.0
    %148 = vmatprep.subr.mxu0 0.0
    %149 = vmatpush2.msra.mxu0 0.0
    %150 = vmatprep.subr.mxu0 0.0
    %151 = vmatpush2.msra.mxu0 0.0
    %152 = vmatprep.subr.mxu0 0.0
    %153 = vmatpush2.msra.mxu0 0.0
    %154 = vmatprep.mubr.f32.mxu0 0.0
    %155 = vmatmul.mubr.f32.gmra.mxu0 %v88
    %v156 = vpop.f32.mrf.mxu0
    %v157 = vadd.f32 %v84, %v156
    %v158 = vpop.f32.mrf.mxu0
    %159 = vdwg.mxu0
    %v160 = vmax.f32 %v157, 0.0
    %v161 = vld [vmem:[%s4] sm:$0xff]
    %v162 = vld [vmem:[%s4 + $0x8] sm:$0xff]
    %v163 = vld [vmem:[%s4 + $0x10] sm:$0xff]
    %v164 = vld [vmem:[%s4 + $0x18] sm:$0xff]
    %v165 = vld [vmem:[%s4 + $0x20] sm:$0xff]
    %v166 = vld [vmem:[%s4 + $0x28] sm:$0xff]
    %v167 = vld [vmem:[%s4 + $0x30] sm:$0xff]
    %v168 = vld [vmem:[%s4 + $0x38] sm:$0xff]
    %v169 = vld [vmem:[%s4 + $0x40] sm:$0xff]
    %v170 = vld [vmem:[%s4 + $0x48] sm:$0xff]
    %v171 = vld [vmem:[%s4 + $0x50] sm:$0xff]
    %v172 = vld [vmem:[%s4 + $0x58] sm:$0xff]
    %v173 = vld [vmem:[%s4 + $0x60] sm:$0xff]
    %v174 = vld [vmem:[%s4 + $0x68] sm:$0xff]
    %v175 = vld [vmem:[%s4 + $0x70] sm:$0xff]
    %v176 = vld [vmem:[%s4 + $0x78] sm:$0xff]
    %v177 = vld [vmem:[%s5] sm:$0x1]
    %v179 = vlaneseq
    %v180 = vshrl.u32 %v179, 7
    %v181 = vsub.s32 0, %v180
    %v182 = vrot.slane %v177, %v181
    %184 = vmatprep.subr.mxu0 0.0
    %185 = vmatpush1.msra.mxu0 %v176
    %186 = vmatprep.subr.mxu0 0.0
    %187 = vmatpush1.msra.mxu0 %v175
    %188 = vmatprep.subr.mxu0 0.0
    %189 = vmatpush1.msra.mxu0 %v174
    %190 = vmatprep.subr.mxu0 0.0
    %191 = vmatpush1.msra.mxu0 %v173
    %192 = vmatprep.subr.mxu0 0.0
    %193 = vmatpush1.msra.mxu0 %v172
    %194 = vmatprep.subr.mxu0 0.0
    %195 = vmatpush1.msra.mxu0 %v171
    %196 = vmatprep.subr.mxu0 0.0
    %197 = vmatpush1.msra.mxu0 %v170
    %198 = vmatprep.subr.mxu0 0.0
    %199 = vmatpush1.msra.mxu0 %v169
    %200 = vmatprep.subr.mxu0 0.0
    %201 = vmatpush1.msra.mxu0 %v168
    %202 = vmatprep.subr.mxu0 0.0
    %203 = vmatpush1.msra.mxu0 %v167
    %204 = vmatprep.subr.mxu0 0.0
    %205 = vmatpush1.msra.mxu0 %v166
    %206 = vmatprep.subr.mxu0 0.0
    %207 = vmatpush1.msra.mxu0 %v165
    %208 = vmatprep.subr.mxu0 0.0
    %209 = vmatpush1.msra.mxu0 %v164
    %210 = vmatprep.subr.mxu0 0.0
    %211 = vmatpush1.msra.mxu0 %v163
    %212 = vmatprep.subr.mxu0 0.0
    %213 = vmatpush1.msra.mxu0 %v162
    %214 = vmatprep.subr.mxu0 0.0
    %215 = vmatpush1.msra.mxu0 %v161
    %216 = vmatprep.subr.mxu0 0.0
    %217 = vmatpush2.msra.mxu0 0.0
    %218 = vmatprep.subr.mxu0 0.0
    %219 = vmatpush2.msra.mxu0 0.0
    %220 = vmatprep.subr.mxu0 0.0
    %221 = vmatpush2.msra.mxu0 0.0
    %222 = vmatprep.subr.mxu0 0.0
    %223 = vmatpush2.msra.mxu0 0.0
    %224 = vmatprep.subr.mxu0 0.0
    %225 = vmatpush2.msra.mxu0 0.0
    %226 = vmatprep.subr.mxu0 0.0
    %227 = vmatpush2.msra.mxu0 0.0
    %228 = vmatprep.subr.mxu0 0.0
    %229 = vmatpush2.msra.mxu0 0.0
    %230 = vmatprep.subr.mxu0 0.0
    %231 = vmatpush2.msra.mxu0 0.0
    %232 = vmatprep.subr.mxu0 0.0
    %233 = vmatpush2.msra.mxu0 0.0
    %234 = vmatprep.subr.mxu0 0.0
    %235 = vmatpush2.msra.mxu0 0.0
    %236 = vmatprep.subr.mxu0 0.0
    %237 = vmatpush2.msra.mxu0 0.0
    %238 = vmatprep.subr.mxu0 0.0
    %239 = vmatpush2.msra.mxu0 0.0
    %240 = vmatprep.subr.mxu0 0.0
    %241 = vmatpush2.msra.mxu0 0.0
    %242 = vmatprep.subr.mxu0 0.0
    %243 = vmatpush2.msra.mxu0 0.0
    %244 = vmatprep.subr.mxu0 0.0
    %245 = vmatpush2.msra.mxu0 0.0
    %246 = vmatprep.subr.mxu0 0.0
    %247 = vmatpush2.msra.mxu0 0.0
    %248 = vmatprep.mubr.f32.mxu0 0.0
    %249 = vmatmul.mubr.f32.gmra.mxu0 %v160
    %v250 = vpop.f32.mrf.mxu0
    %v251 = vadd.f32 %v182, %v250
    %v252 = vpop.f32.mrf.mxu0
    %253 = vdwg.mxu0
    %v254 = vmax.f32 %v251, 0.0
    %v255 = vld [vmem:[%s6] sm:$0xff]
    %v256 = vld [vmem:[%s6 + $0x8] sm:$0xff]
    %v257 = vld [vmem:[%s6 + $0x10] sm:$0xff]
    %v258 = vld [vmem:[%s6 + $0x18] sm:$0xff]
    %v259 = vld [vmem:[%s6 + $0x20] sm:$0xff]
    %v260 = vld [vmem:[%s6 + $0x28] sm:$0xff]
    %v261 = vld [vmem:[%s6 + $0x30] sm:$0xff]
    %v262 = vld [vmem:[%s6 + $0x38] sm:$0xff]
    %v263 = vld [vmem:[%s6 + $0x40] sm:$0xff]
    %v264 = vld [vmem:[%s6 + $0x48] sm:$0xff]
    %v265 = vld [vmem:[%s6 + $0x50] sm:$0xff]
    %v266 = vld [vmem:[%s6 + $0x58] sm:$0xff]
    %v267 = vld [vmem:[%s6 + $0x60] sm:$0xff]
    %v268 = vld [vmem:[%s6 + $0x68] sm:$0xff]
    %v269 = vld [vmem:[%s6 + $0x70] sm:$0xff]
    %v270 = vld [vmem:[%s6 + $0x78] sm:$0xff]
    %v271 = vld [vmem:[%s7] sm:$0x1]
    %v273 = vlaneseq
    %v274 = vshrl.u32 %v273, 7
    %v275 = vsub.s32 0, %v274
    %v276 = vrot.slane %v271, %v275
    %278 = vmatprep.subr.mxu0 0.0
    %279 = vmatpush1.msra.mxu0 %v270
    %280 = vmatprep.subr.mxu0 0.0
    %281 = vmatpush1.msra.mxu0 %v269
    %282 = vmatprep.subr.mxu0 0.0
    %283 = vmatpush1.msra.mxu0 %v268
    %284 = vmatprep.subr.mxu0 0.0
    %285 = vmatpush1.msra.mxu0 %v267
    %286 = vmatprep.subr.mxu0 0.0
    %287 = vmatpush1.msra.mxu0 %v266
    %288 = vmatprep.subr.mxu0 0.0
    %289 = vmatpush1.msra.mxu0 %v265
    %290 = vmatprep.subr.mxu0 0.0
    %291 = vmatpush1.msra.mxu0 %v264
    %292 = vmatprep.subr.mxu0 0.0
    %293 = vmatpush1.msra.mxu0 %v263
    %294 = vmatprep.subr.mxu0 0.0
    %295 = vmatpush1.msra.mxu0 %v262
    %296 = vmatprep.subr.mxu0 0.0
    %297 = vmatpush1.msra.mxu0 %v261
    %298 = vmatprep.subr.mxu0 0.0
    %299 = vmatpush1.msra.mxu0 %v260
    %300 = vmatprep.subr.mxu0 0.0
    %301 = vmatpush1.msra.mxu0 %v259
    %302 = vmatprep.subr.mxu0 0.0
    %303 = vmatpush1.msra.mxu0 %v258
    %304 = vmatprep.subr.mxu0 0.0
    %305 = vmatpush1.msra.mxu0 %v257
    %306 = vmatprep.subr.mxu0 0.0
    %307 = vmatpush1.msra.mxu0 %v256
    %308 = vmatprep.subr.mxu0 0.0
    %309 = vmatpush1.msra.mxu0 %v255
    %310 = vmatprep.subr.mxu0 0.0
    %311 = vmatpush2.msra.mxu0 0.0
    %312 = vmatprep.subr.mxu0 0.0
    %313 = vmatpush2.msra.mxu0 0.0
    %314 = vmatprep.subr.mxu0 0.0
    %315 = vmatpush2.msra.mxu0 0.0
    %316 = vmatprep.subr.mxu0 0.0
    %317 = vmatpush2.msra.mxu0 0.0
    %318 = vmatprep.subr.mxu0 0.0
    %319 = vmatpush2.msra.mxu0 0.0
    %320 = vmatprep.subr.mxu0 0.0
    %321 = vmatpush2.msra.mxu0 0.0
    %322 = vmatprep.subr.mxu0 0.0
    %323 = vmatpush2.msra.mxu0 0.0
    %324 = vmatprep.subr.mxu0 0.0
    %325 = vmatpush2.msra.mxu0 0.0
    %326 = vmatprep.subr.mxu0 0.0
    %327 = vmatpush2.msra.mxu0 0.0
    %328 = vmatprep.subr.mxu0 0.0
    %329 = vmatpush2.msra.mxu0 0.0
    %330 = vmatprep.subr.mxu0 0.0
    %331 = vmatpush2.msra.mxu0 0.0
    %332 = vmatprep.subr.mxu0 0.0
    %333 = vmatpush2.msra.mxu0 0.0
    %334 = vmatprep.subr.mxu0 0.0
    %335 = vmatpush2.msra.mxu0 0.0
    %336 = vmatprep.subr.mxu0 0.0
    %337 = vmatpush2.msra.mxu0 0.0
    %338 = vmatprep.subr.mxu0 0.0
    %339 = vmatpush2.msra.mxu0 0.0
    %340 = vmatprep.subr.mxu0 0.0
    %341 = vmatpush2.msra.mxu0 0.0
    %342 = vmatprep.mubr.f32.mxu0 0.0
    %343 = vmatmul.mubr.f32.gmra.mxu0 %v254
    %v344 = vpop.f32.mrf.mxu0
    %v345 = vadd.f32 %v276, %v344
    %v346 = vpop.f32.mrf.mxu0
    %347 = vdwg.mxu0
    %v348 = vxor.u32 %v345, 2147483648
    %v349 = vmul.f32 %v348, 1.442695
    %v350 = vpow.pop %v349
    %v351 = vadd.f32 %v350, 1.0
    %v352 = vrcp.pop %v351
    %v353 = vmul.f32 1.0, %v352
    %vm354 = vcmask 130048
    %355 = vst.msk [vmem:[%s14] sm:$0xff] %vm354, %v353
    %v356 = vld [vmem:[%s8] sm:$0xff]
    %v357 = vld [vmem:[%s8 + $0x8] sm:$0xff]
    %v358 = vld [vmem:[%s9] sm:$0x1]
    %v360 = vlaneseq
    %v361 = vshrl.u32 %v360, 7
    %v362 = vsub.s32 0, %v361
    %v363 = vrot.slane %v358, %v362
    %v366 = vsel %vm354, %v353, 0
    %368 = vmatprep.subr.mxu0 0.0
    %369 = vmatpush1.msra.mxu0 0.0
    %370 = vmatprep.subr.mxu0 0.0
    %371 = vmatpush1.msra.mxu0 0.0
    %372 = vmatprep.subr.mxu0 0.0
    %373 = vmatpush1.msra.mxu0 0.0
    %374 = vmatprep.subr.mxu0 0.0
    %375 = vmatpush1.msra.mxu0 0.0
    %376 = vmatprep.subr.mxu0 0.0
    %377 = vmatpush1.msra.mxu0 0.0
    %378 = vmatprep.subr.mxu0 0.0
    %379 = vmatpush1.msra.mxu0 0.0
    %380 = vmatprep.subr.mxu0 0.0
    %381 = vmatpush1.msra.mxu0 0.0
    %382 = vmatprep.subr.mxu0 0.0
    %383 = vmatpush1.msra.mxu0 0.0
    %384 = vmatprep.subr.mxu0 0.0
    %385 = vmatpush1.msra.mxu0 0.0
    %386 = vmatprep.subr.mxu0 0.0
    %387 = vmatpush1.msra.mxu0 0.0
    %388 = vmatprep.subr.mxu0 0.0
    %389 = vmatpush1.msra.mxu0 0.0
    %390 = vmatprep.subr.mxu0 0.0
    %391 = vmatpush1.msra.mxu0 0.0
    %392 = vmatprep.subr.mxu0 0.0
    %393 = vmatpush1.msra.mxu0 0.0
    %394 = vmatprep.subr.mxu0 0.0
    %395 = vmatpush1.msra.mxu0 0.0
    %396 = vmatprep.subr.mxu0 0.0
    %397 = vmatpush1.msra.mxu0 %v357
    %398 = vmatprep.subr.mxu0 0.0
    %399 = vmatpush1.msra.mxu0 %v356
    %400 = vmatprep.subr.mxu0 0.0
    %401 = vmatpush2.msra.mxu0 0.0
    %402 = vmatprep.subr.mxu0 0.0
    %403 = vmatpush2.msra.mxu0 0.0
    %404 = vmatprep.subr.mxu0 0.0
    %405 = vmatpush2.msra.mxu0 0.0
    %406 = vmatprep.subr.mxu0 0.0
    %407 = vmatpush2.msra.mxu0 0.0
    %408 = vmatprep.subr.mxu0 0.0
    %409 = vmatpush2.msra.mxu0 0.0
    %410 = vmatprep.subr.mxu0 0.0
    %411 = vmatpush2.msra.mxu0 0.0
    %412 = vmatprep.subr.mxu0 0.0
    %413 = vmatpush2.msra.mxu0 0.0
    %414 = vmatprep.subr.mxu0 0.0
    %415 = vmatpush2.msra.mxu0 0.0
    %416 = vmatprep.subr.mxu0 0.0
    %417 = vmatpush2.msra.mxu0 0.0
    %418 = vmatprep.subr.mxu0 0.0
    %419 = vmatpush2.msra.mxu0 0.0
    %420 = vmatprep.subr.mxu0 0.0
    %421 = vmatpush2.msra.mxu0 0.0
    %422 = vmatprep.subr.mxu0 0.0
    %423 = vmatpush2.msra.mxu0 0.0
    %424 = vmatprep.subr.mxu0 0.0
    %425 = vmatpush2.msra.mxu0 0.0
    %426 = vmatprep.subr.mxu0 0.0
    %427 = vmatpush2.msra.mxu0 0.0
    %428 = vmatprep.subr.mxu0 0.0
    %429 = vmatpush2.msra.mxu0 0.0
    %430 = vmatprep.subr.mxu0 0.0
    %431 = vmatpush2.msra.mxu0 0.0
    %432 = vmatprep.mubr.f32.mxu0 0.0
    %433 = vmatmul.mubr.f32.gmra.mxu0 %v366
    %v434 = vpop.f32.mrf.mxu0
    %v435 = vadd.f32 %v363, %v434
    %v436 = vpop.f32.mrf.mxu0
    %437 = vdwg.mxu0
    %v438 = vmax.f32 %v435, 0.0
    %v439 = vld [vmem:[#allocation2] sm:$0xff]
    %v440 = vld [vmem:[#allocation2 + $0x8] sm:$0xff]
    %v441 = vld [vmem:[#allocation2 + $0x10] sm:$0xff]
    %v442 = vld [vmem:[#allocation2 + $0x18] sm:$0xff]
    %v443 = vld [vmem:[#allocation2 + $0x20] sm:$0xff]
    %v444 = vld [vmem:[#allocation2 + $0x28] sm:$0xff]
    %v445 = vld [vmem:[#allocation2 + $0x30] sm:$0xff]
    %v446 = vld [vmem:[#allocation2 + $0x38] sm:$0xff]
    %v447 = vld [vmem:[#allocation2 + $0x40] sm:$0xff]
    %v448 = vld [vmem:[#allocation2 + $0x48] sm:$0xff]
    %v449 = vld [vmem:[#allocation2 + $0x50] sm:$0xff]
    %v450 = vld [vmem:[#allocation2 + $0x58] sm:$0xff]
    %v451 = vld [vmem:[#allocation2 + $0x60] sm:$0xff]
    %v452 = vld [vmem:[#allocation2 + $0x68] sm:$0xff]
    %v453 = vld [vmem:[#allocation2 + $0x70] sm:$0xff]
    %v454 = vld [vmem:[#allocation2 + $0x78] sm:$0xff]
    %v455 = vld [vmem:[%s11] sm:$0x1]
    %v457 = vlaneseq
    %v458 = vshrl.u32 %v457, 7
    %v459 = vsub.s32 0, %v458
    %v460 = vrot.slane %v455, %v459
    %462 = vmatprep.subr.mxu0 0.0
    %463 = vmatpush1.msra.mxu0 %v454
    %464 = vmatprep.subr.mxu0 0.0
    %465 = vmatpush1.msra.mxu0 %v453
    %466 = vmatprep.subr.mxu0 0.0
    %467 = vmatpush1.msra.mxu0 %v452
    %468 = vmatprep.subr.mxu0 0.0
    %469 = vmatpush1.msra.mxu0 %v451
    %470 = vmatprep.subr.mxu0 0.0
    %471 = vmatpush1.msra.mxu0 %v450
    %472 = vmatprep.subr.mxu0 0.0
    %473 = vmatpush1.msra.mxu0 %v449
    %474 = vmatprep.subr.mxu0 0.0
    %475 = vmatpush1.msra.mxu0 %v448
    %476 = vmatprep.subr.mxu0 0.0
    %477 = vmatpush1.msra.mxu0 %v447
    %478 = vmatprep.subr.mxu0 0.0
    %479 = vmatpush1.msra.mxu0 %v446
    %480 = vmatprep.subr.mxu0 0.0
    %481 = vmatpush1.msra.mxu0 %v445
    %482 = vmatprep.subr.mxu0 0.0
    %483 = vmatpush1.msra.mxu0 %v444
    %484 = vmatprep.subr.mxu0 0.0
    %485 = vmatpush1.msra.mxu0 %v443
    %486 = vmatprep.subr.mxu0 0.0
    %487 = vmatpush1.msra.mxu0 %v442
    %488 = vmatprep.subr.mxu0 0.0
    %489 = vmatpush1.msra.mxu0 %v441
    %490 = vmatprep.subr.mxu0 0.0
    %491 = vmatpush1.msra.mxu0 %v440
    %492 = vmatprep.subr.mxu0 0.0
    %493 = vmatpush1.msra.mxu0 %v439
    %494 = vmatprep.subr.mxu0 0.0
    %495 = vmatpush2.msra.mxu0 0.0
    %496 = vmatprep.subr.mxu0 0.0
    %497 = vmatpush2.msra.mxu0 0.0
    %498 = vmatprep.subr.mxu0 0.0
    %499 = vmatpush2.msra.mxu0 0.0
    %500 = vmatprep.subr.mxu0 0.0
    %501 = vmatpush2.msra.mxu0 0.0
    %502 = vmatprep.subr.mxu0 0.0
    %503 = vmatpush2.msra.mxu0 0.0
    %504 = vmatprep.subr.mxu0 0.0
    %505 = vmatpush2.msra.mxu0 0.0
    %506 = vmatprep.subr.mxu0 0.0
    %507 = vmatpush2.msra.mxu0 0.0
    %508 = vmatprep.subr.mxu0 0.0
    %509 = vmatpush2.msra.mxu0 0.0
    %510 = vmatprep.subr.mxu0 0.0
    %511 = vmatpush2.msra.mxu0 0.0
    %512 = vmatprep.subr.mxu0 0.0
    %513 = vmatpush2.msra.mxu0 0.0
    %514 = vmatprep.subr.mxu0 0.0
    %515 = vmatpush2.msra.mxu0 0.0
    %516 = vmatprep.subr.mxu0 0.0
    %517 = vmatpush2.msra.mxu0 0.0
    %518 = vmatprep.subr.mxu0 0.0
    %519 = vmatpush2.msra.mxu0 0.0
    %520 = vmatprep.subr.mxu0 0.0
    %521 = vmatpush2.msra.mxu0 0.0
    %522 = vmatprep.subr.mxu0 0.0
    %523 = vmatpush2.msra.mxu0 0.0
    %524 = vmatprep.subr.mxu0 0.0
    %525 = vmatpush2.msra.mxu0 0.0
    %526 = vmatprep.mubr.f32.mxu0 0.0
    %527 = vmatmul.mubr.f32.gmra.mxu0 %v438
    %v528 = vpop.f32.mrf.mxu0
    %v529 = vadd.f32 %v460, %v528
    %v530 = vpop.f32.mrf.mxu0
    %531 = vdwg.mxu0
    %v532 = vmax.f32 %v529, 0.0
    %v533 = vld [vmem:[#allocation4] sm:$0xff]
    %v534 = vld [vmem:[#allocation4 + $0x8] sm:$0xff]
    %v535 = vld [vmem:[#allocation4 + $0x10] sm:$0xff]
    %v536 = vld [vmem:[#allocation4 + $0x18] sm:$0xff]
    %v537 = vld [vmem:[#allocation4 + $0x20] sm:$0xff]
    %v538 = vld [vmem:[#allocation4 + $0x28] sm:$0xff]
    %v539 = vld [vmem:[#allocation4 + $0x30] sm:$0xff]
    %v540 = vld [vmem:[#allocation4 + $0x38] sm:$0xff]
    %v541 = vld [vmem:[#allocation4 + $0x40] sm:$0xff]
    %v542 = vld [vmem:[#allocation4 + $0x48] sm:$0xff]
    %v543 = vld [vmem:[#allocation4 + $0x50] sm:$0xff]
    %v544 = vld [vmem:[#allocation4 + $0x58] sm:$0xff]
    %v545 = vld [vmem:[#allocation4 + $0x60] sm:$0xff]
    %v546 = vld [vmem:[#allocation4 + $0x68] sm:$0xff]
    %v547 = vld [vmem:[#allocation4 + $0x70] sm:$0xff]
    %v548 = vld [vmem:[#allocation4 + $0x78] sm:$0xff]
    %v549 = vld [vmem:[%s13] sm:$0x1]
    %v551 = vlaneseq
    %v552 = vshrl.u32 %v551, 7
    %v553 = vsub.s32 0, %v552
    %v554 = vrot.slane %v549, %v553
    %556 = vmatprep.subr.mxu0 0.0
    %557 = vmatpush1.msra.mxu0 %v548
    %558 = vmatprep.subr.mxu0 0.0
    %559 = vmatpush1.msra.mxu0 %v547
    %560 = vmatprep.subr.mxu0 0.0
    %561 = vmatpush1.msra.mxu0 %v546
    %562 = vmatprep.subr.mxu0 0.0
    %563 = vmatpush1.msra.mxu0 %v545
    %564 = vmatprep.subr.mxu0 0.0
    %565 = vmatpush1.msra.mxu0 %v544
    %566 = vmatprep.subr.mxu0 0.0
    %567 = vmatpush1.msra.mxu0 %v543
    %568 = vmatprep.subr.mxu0 0.0
    %569 = vmatpush1.msra.mxu0 %v542
    %570 = vmatprep.subr.mxu0 0.0
    %571 = vmatpush1.msra.mxu0 %v541
    %572 = vmatprep.subr.mxu0 0.0
    %573 = vmatpush1.msra.mxu0 %v540
    %574 = vmatprep.subr.mxu0 0.0
    %575 = vmatpush1.msra.mxu0 %v539
    %576 = vmatprep.subr.mxu0 0.0
    %577 = vmatpush1.msra.mxu0 %v538
    %578 = vmatprep.subr.mxu0 0.0
    %579 = vmatpush1.msra.mxu0 %v537
    %580 = vmatprep.subr.mxu0 0.0
    %581 = vmatpush1.msra.mxu0 %v536
    %582 = vmatprep.subr.mxu0 0.0
    %583 = vmatpush1.msra.mxu0 %v535
    %584 = vmatprep.subr.mxu0 0.0
    %585 = vmatpush1.msra.mxu0 %v534
    %586 = vmatprep.subr.mxu0 0.0
    %587 = vmatpush1.msra.mxu0 %v533
    %588 = vmatprep.subr.mxu0 0.0
    %589 = vmatpush2.msra.mxu0 0.0
    %590 = vmatprep.subr.mxu0 0.0
    %591 = vmatpush2.msra.mxu0 0.0
    %592 = vmatprep.subr.mxu0 0.0
    %593 = vmatpush2.msra.mxu0 0.0
    %594 = vmatprep.subr.mxu0 0.0
    %595 = vmatpush2.msra.mxu0 0.0
    %596 = vmatprep.subr.mxu0 0.0
    %597 = vmatpush2.msra.mxu0 0.0
    %598 = vmatprep.subr.mxu0 0.0
    %599 = vmatpush2.msra.mxu0 0.0
    %600 = vmatprep.subr.mxu0 0.0
    %601 = vmatpush2.msra.mxu0 0.0
    %602 = vmatprep.subr.mxu0 0.0
    %603 = vmatpush2.msra.mxu0 0.0
    %604 = vmatprep.subr.mxu0 0.0
    %605 = vmatpush2.msra.mxu0 0.0
    %606 = vmatprep.subr.mxu0 0.0
    %607 = vmatpush2.msra.mxu0 0.0
    %608 = vmatprep.subr.mxu0 0.0
    %609 = vmatpush2.msra.mxu0 0.0
    %610 = vmatprep.subr.mxu0 0.0
    %611 = vmatpush2.msra.mxu0 0.0
    %612 = vmatprep.subr.mxu0 0.0
    %613 = vmatpush2.msra.mxu0 0.0
    %614 = vmatprep.subr.mxu0 0.0
    %615 = vmatpush2.msra.mxu0 0.0
    %616 = vmatprep.subr.mxu0 0.0
    %617 = vmatpush2.msra.mxu0 0.0
    %618 = vmatprep.subr.mxu0 0.0
    %619 = vmatpush2.msra.mxu0 0.0
    %620 = vmatprep.mubr.f32.mxu0 0.0
    %621 = vmatmul.mubr.f32.gmra.mxu0 %v532
    %v622 = vpop.f32.mrf.mxu0
    %v623 = vadd.f32 %v554, %v622
    %v624 = vpop.f32.mrf.mxu0
    %625 = vdwg.mxu0
    %v626 = vld [vmem:[%s1] sm:$0xff]
    %v628 = vsel %vm354, %v626, 0
    %630 = vmatprep.subr.mxu0 0.0
    %631 = vmatpush1.msra.mxu0 0.0
    %632 = vmatprep.subr.mxu0 0.0
    %633 = vmatpush1.msra.mxu0 0.0
    %634 = vmatprep.subr.mxu0 0.0
    %635 = vmatpush1.msra.mxu0 0.0
    %636 = vmatprep.subr.mxu0 0.0
    %637 = vmatpush1.msra.mxu0 0.0
    %638 = vmatprep.subr.mxu0 0.0
    %639 = vmatpush1.msra.mxu0 0.0
    %640 = vmatprep.subr.mxu0 0.0
    %641 = vmatpush1.msra.mxu0 0.0
    %642 = vmatprep.subr.mxu0 0.0
    %643 = vmatpush1.msra.mxu0 0.0
    %644 = vmatprep.subr.mxu0 0.0
    %645 = vmatpush1.msra.mxu0 0.0
    %646 = vmatprep.subr.mxu0 0.0
    %647 = vmatpush1.msra.mxu0 0.0
    %648 = vmatprep.subr.mxu0 0.0
    %649 = vmatpush1.msra.mxu0 0.0
    %650 = vmatprep.subr.mxu0 0.0
    %651 = vmatpush1.msra.mxu0 0.0
    %652 = vmatprep.subr.mxu0 0.0
    %653 = vmatpush1.msra.mxu0 0.0
    %654 = vmatprep.subr.mxu0 0.0
    %655 = vmatpush1.msra.mxu0 0.0
    %656 = vmatprep.subr.mxu0 0.0
    %657 = vmatpush1.msra.mxu0 0.0
    %658 = vmatprep.subr.mxu0 0.0
    %659 = vmatpush1.msra.mxu0 %v357
    %660 = vmatprep.subr.mxu0 0.0
    %661 = vmatpush1.msra.mxu0 %v356
    %662 = vmatprep.subr.mxu0 0.0
    %663 = vmatpush2.msra.mxu0 0.0
    %664 = vmatprep.subr.mxu0 0.0
    %665 = vmatpush2.msra.mxu0 0.0
    %666 = vmatprep.subr.mxu0 0.0
    %667 = vmatpush2.msra.mxu0 0.0
    %668 = vmatprep.subr.mxu0 0.0
    %669 = vmatpush2.msra.mxu0 0.0
    %670 = vmatprep.subr.mxu0 0.0
    %671 = vmatpush2.msra.mxu0 0.0
    %672 = vmatprep.subr.mxu0 0.0
    %673 = vmatpush2.msra.mxu0 0.0
    %674 = vmatprep.subr.mxu0 0.0
    %675 = vmatpush2.msra.mxu0 0.0
    %676 = vmatprep.subr.mxu0 0.0
    %677 = vmatpush2.msra.mxu0 0.0
    %678 = vmatprep.subr.mxu0 0.0
    %679 = vmatpush2.msra.mxu0 0.0
    %680 = vmatprep.subr.mxu0 0.0
    %681 = vmatpush2.msra.mxu0 0.0
    %682 = vmatprep.subr.mxu0 0.0
    %683 = vmatpush2.msra.mxu0 0.0
    %684 = vmatprep.subr.mxu0 0.0
    %685 = vmatpush2.msra.mxu0 0.0
    %686 = vmatprep.subr.mxu0 0.0
    %687 = vmatpush2.msra.mxu0 0.0
    %688 = vmatprep.subr.mxu0 0.0
    %689 = vmatpush2.msra.mxu0 0.0
    %690 = vmatprep.subr.mxu0 0.0
    %691 = vmatpush2.msra.mxu0 0.0
    %692 = vmatprep.subr.mxu0 0.0
    %693 = vmatpush2.msra.mxu0 0.0
    %694 = vmatprep.mubr.f32.mxu0 0.0
    %695 = vmatmul.mubr.f32.gmra.mxu0 %v628
    %v696 = vpop.f32.mrf.mxu0
    %v697 = vadd.f32 %v363, %v696
    %v698 = vpop.f32.mrf.mxu0
    %699 = vdwg.mxu0
    %v700 = vmax.f32 %v697, 0.0
    %701 = vmatprep.subr.mxu0 0.0
    %702 = vmatpush1.msra.mxu0 %v454
    %703 = vmatprep.subr.mxu0 0.0
    %704 = vmatpush1.msra.mxu0 %v453
    %705 = vmatprep.subr.mxu0 0.0
    %706 = vmatpush1.msra.mxu0 %v452
    %707 = vmatprep.subr.mxu0 0.0
    %708 = vmatpush1.msra.mxu0 %v451
    %709 = vmatprep.subr.mxu0 0.0
    %710 = vmatpush1.msra.mxu0 %v450
    %711 = vmatprep.subr.mxu0 0.0
    %712 = vmatpush1.msra.mxu0 %v449
    %713 = vmatprep.subr.mxu0 0.0
    %714 = vmatpush1.msra.mxu0 %v448
    %715 = vmatprep.subr.mxu0 0.0
    %716 = vmatpush1.msra.mxu0 %v447
    %717 = vmatprep.subr.mxu0 0.0
    %718 = vmatpush1.msra.mxu0 %v446
    %719 = vmatprep.subr.mxu0 0.0
    %720 = vmatpush1.msra.mxu0 %v445
    %721 = vmatprep.subr.mxu0 0.0
    %722 = vmatpush1.msra.mxu0 %v444
    %723 = vmatprep.subr.mxu0 0.0
    %724 = vmatpush1.msra.mxu0 %v443
    %725 = vmatprep.subr.mxu0 0.0
    %726 = vmatpush1.msra.mxu0 %v442
    %727 = vmatprep.subr.mxu0 0.0
    %728 = vmatpush1.msra.mxu0 %v441
    %729 = vmatprep.subr.mxu0 0.0
    %730 = vmatpush1.msra.mxu0 %v440
    %731 = vmatprep.subr.mxu0 0.0
    %732 = vmatpush1.msra.mxu0 %v439
    %733 = vmatprep.subr.mxu0 0.0
    %734 = vmatpush2.msra.mxu0 0.0
    %735 = vmatprep.subr.mxu0 0.0
    %736 = vmatpush2.msra.mxu0 0.0
    %737 = vmatprep.subr.mxu0 0.0
    %738 = vmatpush2.msra.mxu0 0.0
    %739 = vmatprep.subr.mxu0 0.0
    %740 = vmatpush2.msra.mxu0 0.0
    %741 = vmatprep.subr.mxu0 0.0
    %742 = vmatpush2.msra.mxu0 0.0
    %743 = vmatprep.subr.mxu0 0.0
    %744 = vmatpush2.msra.mxu0 0.0
    %745 = vmatprep.subr.mxu0 0.0
    %746 = vmatpush2.msra.mxu0 0.0
    %747 = vmatprep.subr.mxu0 0.0
    %748 = vmatpush2.msra.mxu0 0.0
    %749 = vmatprep.subr.mxu0 0.0
    %750 = vmatpush2.msra.mxu0 0.0
    %751 = vmatprep.subr.mxu0 0.0
    %752 = vmatpush2.msra.mxu0 0.0
    %753 = vmatprep.subr.mxu0 0.0
    %754 = vmatpush2.msra.mxu0 0.0
    %755 = vmatprep.subr.mxu0 0.0
    %756 = vmatpush2.msra.mxu0 0.0
    %757 = vmatprep.subr.mxu0 0.0
    %758 = vmatpush2.msra.mxu0 0.0
    %759 = vmatprep.subr.mxu0 0.0
    %760 = vmatpush2.msra.mxu0 0.0
    %761 = vmatprep.subr.mxu0 0.0
    %762 = vmatpush2.msra.mxu0 0.0
    %763 = vmatprep.subr.mxu0 0.0
    %764 = vmatpush2.msra.mxu0 0.0
    %765 = vmatprep.mubr.f32.mxu0 0.0
    %766 = vmatmul.mubr.f32.gmra.mxu0 %v700
    %v767 = vpop.f32.mrf.mxu0
    %v768 = vadd.f32 %v460, %v767
    %v769 = vpop.f32.mrf.mxu0
    %770 = vdwg.mxu0
    %v771 = vmax.f32 %v768, 0.0
    %772 = vmatprep.subr.mxu0 0.0
    %773 = vmatpush1.msra.mxu0 %v548
    %774 = vmatprep.subr.mxu0 0.0
    %775 = vmatpush1.msra.mxu0 %v547
    %776 = vmatprep.subr.mxu0 0.0
    %777 = vmatpush1.msra.mxu0 %v546
    %778 = vmatprep.subr.mxu0 0.0
    %779 = vmatpush1.msra.mxu0 %v545
    %780 = vmatprep.subr.mxu0 0.0
    %781 = vmatpush1.msra.mxu0 %v544
    %782 = vmatprep.subr.mxu0 0.0
    %783 = vmatpush1.msra.mxu0 %v543
    %784 = vmatprep.subr.mxu0 0.0
    %785 = vmatpush1.msra.mxu0 %v542
    %786 = vmatprep.subr.mxu0 0.0
    %787 = vmatpush1.msra.mxu0 %v541
    %788 = vmatprep.subr.mxu0 0.0
    %789 = vmatpush1.msra.mxu0 %v540
    %790 = vmatprep.subr.mxu0 0.0
    %791 = vmatpush1.msra.mxu0 %v539
    %792 = vmatprep.subr.mxu0 0.0
    %793 = vmatpush1.msra.mxu0 %v538
    %794 = vmatprep.subr.mxu0 0.0
    %795 = vmatpush1.msra.mxu0 %v537
    %796 = vmatprep.subr.mxu0 0.0
    %797 = vmatpush1.msra.mxu0 %v536
    %798 = vmatprep.subr.mxu0 0.0
    %799 = vmatpush1.msra.mxu0 %v535
    %800 = vmatprep.subr.mxu0 0.0
    %801 = vmatpush1.msra.mxu0 %v534
    %802 = vmatprep.subr.mxu0 0.0
    %803 = vmatpush1.msra.mxu0 %v533
    %804 = vmatprep.subr.mxu0 0.0
    %805 = vmatpush2.msra.mxu0 0.0
    %806 = vmatprep.subr.mxu0 0.0
    %807 = vmatpush2.msra.mxu0 0.0
    %808 = vmatprep.subr.mxu0 0.0
    %809 = vmatpush2.msra.mxu0 0.0
    %810 = vmatprep.subr.mxu0 0.0
    %811 = vmatpush2.msra.mxu0 0.0
    %812 = vmatprep.subr.mxu0 0.0
    %813 = vmatpush2.msra.mxu0 0.0
    %814 = vmatprep.subr.mxu0 0.0
    %815 = vmatpush2.msra.mxu0 0.0
    %816 = vmatprep.subr.mxu0 0.0
    %817 = vmatpush2.msra.mxu0 0.0
    %818 = vmatprep.subr.mxu0 0.0
    %819 = vmatpush2.msra.mxu0 0.0
    %820 = vmatprep.subr.mxu0 0.0
    %821 = vmatpush2.msra.mxu0 0.0
    %822 = vmatprep.subr.mxu0 0.0
    %823 = vmatpush2.msra.mxu0 0.0
    %824 = vmatprep.subr.mxu0 0.0
    %825 = vmatpush2.msra.mxu0 0.0
    %826 = vmatprep.subr.mxu0 0.0
    %827 = vmatpush2.msra.mxu0 0.0
    %828 = vmatprep.subr.mxu0 0.0
    %829 = vmatpush2.msra.mxu0 0.0
    %830 = vmatprep.subr.mxu0 0.0
    %831 = vmatpush2.msra.mxu0 0.0
    %832 = vmatprep.subr.mxu0 0.0
    %833 = vmatpush2.msra.mxu0 0.0
    %834 = vmatprep.subr.mxu0 0.0
    %835 = vmatpush2.msra.mxu0 0.0
    %836 = vmatprep.mubr.f32.mxu0 0.0
    %837 = vmatmul.mubr.f32.gmra.mxu0 %v771
    %v838 = vpop.f32.mrf.mxu0
    %v839 = vadd.f32 %v554, %v838
    %v840 = vpop.f32.mrf.mxu0
    %841 = vdwg.mxu0
    %842 = vst [vmem:[%s15] sm:$0xff] %v623
    %843 = vst [vmem:[%s15 + $0x8] sm:$0xff] %v839
    // Predicated region
    $region66: #{_fused_forward.1} parent=1 // pred_check
      _
    $region67: #{_fused_forward.1} parent=1 // pred_check_branch
      %845 = sbr.rel (0) target = $region69
    $region68: #{_fused_forward.1} parent=1 // pred_region
      _
    $region69: #{_fused_forward.1} parent=1 // pred_fallthru
      _
    // Predicated region
    $region70: #{_fused_forward.1} parent=1 // pred_check
      _
    $region71: #{_fused_forward.1} parent=1 // pred_check_branch
      %847 = sbr.rel (0) target = $region73
    $region72: #{_fused_forward.1} parent=1 // pred_region
      _
    $region73: #{_fused_forward.1} parent=1 // pred_fallthru
      _
    // Predicated region
    $region74: #{_fused_forward.1} parent=1 // pred_check
      _
    $region75: #{_fused_forward.1} parent=1 // pred_check_branch
      %849 = sbr.rel (0) target = $region77
    $region76: #{_fused_forward.1} parent=1 // pred_region
      _
    $region77: #{_fused_forward.1} parent=1 // pred_fallthru
      _
    // Predicated region
    $region78: #{_fused_forward.1} parent=1 // pred_check
      _
    $region79: #{_fused_forward.1} parent=1 // pred_check_branch
      %851 = sbr.rel (0) target = $region81
    $region80: #{_fused_forward.1} parent=1 // pred_region
      _
    $region81: #{_fused_forward.1} parent=1 // pred_fallthru
      _
    %852 = vsyncpa [#allocation3], 1
    %853 = vsyncpa [#allocation5], 1

</llo_original>
